<compile_context>
chip_gen: v7x
topology: tpu7x:2x2x1
jax: 0.10.0
libtpu: 0.0.40
codegen_flags: <defaults>
</compile_context>

<pallas_src>
import functools
import math

import jax
import jax.numpy as jnp
from jax.experimental import pallas as pl
from jax.experimental.pallas import tpu as pltpu


# --------------------------------- fused kernel --------------------------------- #

def _fused_sublayer_kernel(*refs, eps, has_mask, keep_scale):
    """One (i, j, k) grid step of  out = x + dropout(LayerNorm(x) @ W + bias)."""
    if has_mask:
        (x_ref, w_ref, a_ref, b_ref, bias_ref, mask_ref,
         o_ref, ln_sc, res_sc, acc_sc) = refs
    else:
        (x_ref, w_ref, a_ref, b_ref, bias_ref,
         o_ref, ln_sc, res_sc, acc_sc) = refs
        mask_ref = None

    j = pl.program_id(1)
    k = pl.program_id(2)
    nk = pl.num_programs(2)

    tm, d_in = x_ref.shape
    nk_s, _, tk = ln_sc.shape          # static chunking of the staged LayerNorm
    nj_s, _, tn = res_sc.shape         # static chunking of the staged residual

    # ---- once per row tile (i): LayerNorm + stage LN / residual slabs in VMEM. ----
    # Runs only at the first (j, k) step; the scratches persist across the j / k loops
    # (hence j is "arbitrary", not "parallel").
    @pl.when((j == 0) & (k == 0))
    def _():
        # Two-pass, chunked LayerNorm statistics in f32 (no catastrophic cancellation;
        # intermediates stay near vreg scale). All slices below are static.
        s = jnp.zeros((tm, 1), jnp.float32)
        for kk in range(nk_s):
            s = s + jnp.sum(x_ref[:, kk * tk:(kk + 1) * tk].astype(jnp.float32),
                            axis=-1, keepdims=True)
        mean = s * (1.0 / d_in)
        sq = jnp.zeros((tm, 1), jnp.float32)
        for kk in range(nk_s):
            xc = x_ref[:, kk * tk:(kk + 1) * tk].astype(jnp.float32) - mean
            sq = sq + jnp.sum(xc * xc, axis=-1, keepdims=True)
        # torch.std(-1) is UNBIASED -> divide by (D - 1); eps is added to the std.
        var = sq * (1.0 / (d_in - 1))
        rinv = 1.0 / (jnp.sqrt(var) + eps)          # cold path: once per row tile
        # Stage LayerNorm(x) chunks in the MXU dtype (used by every (j, k) step).
        for kk in range(nk_s):
            xc = x_ref[:, kk * tk:(kk + 1) * tk].astype(jnp.float32) - mean
            ln_sc[kk] = (a_ref[:, kk * tk:(kk + 1) * tk].astype(jnp.float32) * xc * rinv
                         + b_ref[:, kk * tk:(kk + 1) * tk].astype(jnp.float32)
                         ).astype(ln_sc.dtype)
        # Stage the residual slabs so x never has to be re-read from HBM.
        for jj in range(nj_s):
            res_sc[jj] = x_ref[:, jj * tn:(jj + 1) * tn]

    @pl.when(k == 0)
    def _():
        acc_sc[...] = jnp.zeros_like(acc_sc)

    # ---- MXU: one K-tile of LayerNorm(x) @ W, accumulated in f32. ------------------
    prec = jax.lax.Precision.HIGHEST if w_ref.dtype == jnp.float32 else None
    acc_sc[...] += jnp.dot(ln_sc[k], w_ref[...],
                           preferred_element_type=jnp.float32, precision=prec)

    # ---- epilogue on the last K step: bias + dropout + residual, lane-dense store. --
    @pl.when(k == nk - 1)
    def _():
        y = acc_sc[...] + bias_ref[...].astype(jnp.float32)
        if mask_ref is not None:               # static Python bool (train and p > 0)
            y = y * (mask_ref[...].astype(jnp.float32) * keep_scale)   # scale in f32
        o_ref[...] = (res_sc[j].astype(jnp.float32) + y).astype(o_ref.dtype)


# ------------------------------------ helpers ------------------------------------ #

def _tile(dim, target, align):
    """Largest block size keeping the grid exact: the full dim if it is small,
    otherwise the biggest multiple of `align` that divides `dim` and is <= target."""
    if dim <= target:
        return dim
    t = (min(target, dim) // align) * align
    while t >= align:
        if dim % t == 0:
            return t
        t -= align
    return dim


def _keep_bits(key, shape, p):
    """Bernoulli keep-bits for inverted dropout (True = keep, prob 1-p)."""
    if p <= 0.0:
        return jnp.ones(shape, jnp.bool_)
    if p >= 1.0:
        return jnp.zeros(shape, jnp.bool_)
    return jax.random.bernoulli(key, 1.0 - p, shape)


def _reference(x2, w, bias, a_2, b_2, *, eps, mask=None, mxu_dtype=jnp.float32):
    """Pure-JAX reference with the exact PyTorch-module semantics."""
    mean = jnp.mean(x2, axis=-1, keepdims=True)
    xc = x2 - mean
    var = jnp.sum(xc * xc, axis=-1, keepdims=True) / (x2.shape[-1] - 1)   # unbiased
    normed = a_2 * xc / (jnp.sqrt(var) + eps) + b_2
    if mxu_dtype == jnp.float32:
        sub = jnp.dot(normed, w, precision=jax.lax.Precision.HIGHEST)
    else:
        sub = jnp.dot(normed.astype(mxu_dtype), w.astype(mxu_dtype),
                      preferred_element_type=jnp.float32)
    sub = sub + bias
    if mask is not None:
        sub = sub * mask
    return x2 + sub


def _default_vmem_limit():
    cap = 64 * 1024 * 1024
    try:
        cap = int(getattr(pltpu.get_tpu_info(), "vmem_capacity_bytes", cap) or cap)
    except Exception:
        pass
    # Scoped limit = half the physical VMEM: 64 MiB on v5e/v6e (128 MiB physical),
    # 32 MiB on v7x (64 MiB physical) -- leaves pipelining / compiler headroom.
    return max(32 * 1024 * 1024, min(cap // 2, 96 * 1024 * 1024))


# ------------------------------------ wrapper ------------------------------------ #

def sublayer_connection(x, w, bias, a_2, b_2, *, eps=1e-6, dropout_p=0.1,
                        train=False, dropout_key=None,
                        tile_m=256, tile_n=1024, tile_k=512,
                        mxu_dtype=jnp.bfloat16, vmem_limit_bytes=None):
    """Fused SublayerConnection forward: x + dropout(LayerNorm(x) @ w + bias).

    x: [..., D]; w: [D, D]; bias / a_2 / b_2: [D].
    mxu_dtype=jnp.bfloat16 (default) runs the matmul at the bf16 MXU peak with an f32
    accumulator; pass jnp.float32 for bit-accurate (Precision.HIGHEST) matmuls.
    """
    # TODO(synk): the PyTorch module takes an arbitrary `sublayer` callable; only a
    # Linear sublayer can be fused into this single kernel.
    *lead, d_in = x.shape
    n = math.prod(lead) if lead else 1
    d_out = w.shape[1]
    assert w.shape[0] == d_in and d_out == d_in, "residual add needs matching widths"
    assert d_in > 1, "unbiased std (torch.std) needs at least 2 features"

    p = min(max(float(dropout_p), 0.0), 1.0)
    has_mask = bool(train) and p > 0.0

    x2 = x.reshape(n, d_in)
    a2 = jnp.asarray(a_2, jnp.float32).reshape(1, d_in)
    b2 = jnp.asarray(b_2, jnp.float32).reshape(1, d_in)
    bias2 = jnp.asarray(bias, jnp.float32).reshape(1, d_out)
    w_mxu = jnp.asarray(w).astype(mxu_dtype)       # pre-cast once (halves W HBM bytes)

    if vmem_limit_bytes is None:
        vmem_limit_bytes = _default_vmem_limit()

    # ---- row tiling (sublane axis); pad ragged row counts instead of huge blocks ----
    row_align = 16 if has_mask else 8          # bf16 mask packs 16 rows / sublane word
    n_orig = n
    tm = _tile(n, tile_m, row_align)
    if n > tile_m and tm == n:
        # No aligned divisor <= tile_m: pad the rows to a tile multiple (padded rows
        # are computed and discarded; all-zero rows stay finite through LN / matmul).
        tm = max(row_align, (min(tile_m, n) // row_align) * row_align)
        n = ((n_orig + tm - 1) // tm) * tm
        x2 = jnp.pad(x2, ((0, n - n_orig), (0, 0)))
    tn = _tile(d_out, tile_n, 128)     # lane-dense output tile (full width or k*128)
    tk = _tile(d_in, tile_k, 128)      # contraction tile
    # TODO(synk): a ragged D (no 128-aligned divisor) falls back to a full-width block;
    # padding the feature dim would need masking inside the LayerNorm statistics.

    # ---- VMEM budget: shrink the row tile if the resident slabs would not fit. ------
    x_b = jnp.dtype(x2.dtype).itemsize
    w_b = jnp.dtype(mxu_dtype).itemsize
    o_b = jnp.dtype(x.dtype).itemsize
    m_b = 2 if has_mask else 0

    def _vmem_est(tm_):
        return (2 * tm_ * d_in * x_b            # resident x row tile (double-buffered)
                + 2 * tk * tn * w_b             # W tiles
                + 2 * tm_ * tn * o_b            # output tiles
                + 2 * tm_ * tn * m_b            # dropout-mask tiles
                + 2 * tn * 4 + 4 * d_in * 4     # bias / a_2 / b_2 blocks
                + tm_ * d_in * w_b              # LN scratch       (nk, tm, tk)
                + tm_ * d_in * x_b              # residual scratch (nj, tm, tn)
                + tm_ * tn * 4)                 # f32 accumulator

    budget = int(0.9 * vmem_limit_bytes)
    while _vmem_est(tm) > budget and tm > row_align:
        cand = _tile(n, max(row_align, tm // 2), row_align)
        if cand >= tm:
            break
        tm = cand

    nk = d_in // tk
    nj = d_out // tn
    grid = (n // tm, nj, nk)

    in_specs = [
        # The ONLY x stream: one (tm, D) row tile per i, resident across all j / k.
        pl.BlockSpec((tm, d_in), lambda i, j, k: (i, 0)),
        pl.BlockSpec((tk, tn), lambda i, j, k: (k, j)),     # W tile (already mxu_dtype)
        pl.BlockSpec((1, d_in), lambda i, j, k: (0, 0)),    # a_2 (resident, full width)
        pl.BlockSpec((1, d_in), lambda i, j, k: (0, 0)),    # b_2 (resident, full width)
        pl.BlockSpec((1, tn), lambda i, j, k: (0, j)),      # bias sliver (re-fetched
                                                            #   only when j changes)
    ]
    inputs = [x2, w_mxu, a2, b2, bias2]

    keep_scale = 1.0
    if has_mask:
        if dropout_key is None:
            dropout_key = jax.random.PRNGKey(0)
        # TODO(synk): generating the mask in-kernel with pltpu.prng_seed/prng_random_bits
        # would remove this HBM stream entirely; bf16 keep-bits already halve it and the
        # 1/(1-p) scale is applied in f32 inside the kernel epilogue.
        keep = _keep_bits(dropout_key, (n_orig, d_out), p).astype(jnp.bfloat16)
        if n != n_orig:
            keep = jnp.pad(keep, ((0, n - n_orig), (0, 0)))
        keep_scale = (1.0 / (1.0 - p)) if p < 1.0 else 1.0
        in_specs.append(pl.BlockSpec((tm, tn), lambda i, j, k: (i, j)))
        inputs.append(keep)

    kernel = functools.partial(_fused_sublayer_kernel, eps=float(eps),
                               has_mask=has_mask, keep_scale=keep_scale)

    out2 = pl.pallas_call(
        kernel,
        grid=grid,
        in_specs=in_specs,
        out_specs=pl.BlockSpec((tm, tn), lambda i, j, k: (i, j)),
        out_shape=jax.ShapeDtypeStruct((n, d_out), x.dtype),
        scratch_shapes=[
            pltpu.VMEM((nk, tm, tk), mxu_dtype),   # staged LayerNorm(x), MXU dtype
            pltpu.VMEM((nj, tm, tn), x2.dtype),    # staged residual slabs
            pltpu.VMEM((tm, tn), jnp.float32),     # f32 matmul accumulator
        ],
        compiler_params=pltpu.CompilerParams(
            # i shards across v7x's two TensorCores; j and k are serial so the staged
            # LN / residual scratches are valid across the whole row tile.
            dimension_semantics=("parallel", "arbitrary", "arbitrary"),
            vmem_limit_bytes=int(vmem_limit_bytes),
        ),
    )(*inputs)

    if n != n_orig:
        out2 = out2[:n_orig]
    return out2.reshape(x.shape)


# -------------------------------------- main -------------------------------------- #

if __name__ == "__main__":
    key = jax.random.PRNGKey(0)
    kx, kw, kb, ka, kg, kd = jax.random.split(key, 6)

    # ---- small shapes implied by the module: batch=2, seq=8, hidden=32 -------------
    batch, seq, hidden = 2, 8, 32
    x = jax.random.normal(kx, (batch, seq, hidden), jnp.float32)
    w = jax.random.normal(kw, (hidden, hidden), jnp.float32) / jnp.sqrt(hidden)
    bias = 0.5 * jax.random.normal(kb, (hidden,), jnp.float32)
    a_2 = 1.0 + 0.1 * jax.random.normal(ka, (hidden,), jnp.float32)   # LN gain
    b_2 = 0.1 * jax.random.normal(kg, (hidden,), jnp.float32)         # LN shift
    x2d = x.reshape(-1, hidden)

    # (1) eval mode (dropout = identity), exact f32 MXU path, tight tolerance.
    out_eval = sublayer_connection(x, w, bias, a_2, b_2, dropout_p=0.1, train=False,
                                   mxu_dtype=jnp.float32)
    out_eval = jax.block_until_ready(out_eval)
    ref_eval = _reference(x2d, w, bias, a_2, b_2, eps=1e-6)
    assert out_eval.shape == x.shape
    assert jnp.allclose(out_eval.reshape(-1, hidden), ref_eval, atol=1e-3, rtol=1e-3), \
        "eval-mode mismatch vs pure-JAX reference"

    # (2) train mode: the keep-bits are a deterministic function of the key, so the
    # reference applies the identical mask.
    p = 0.25
    out_tr = sublayer_connection(x, w, bias, a_2, b_2, dropout_p=p, train=True,
                                 dropout_key=kd, mxu_dtype=jnp.float32)
    out_tr = jax.block_until_ready(out_tr)
    mask = _keep_bits(kd, (batch * seq, hidden), p).astype(jnp.float32) * (1.0 / (1.0 - p))
    ref_tr = _reference(x2d, w, bias, a_2, b_2, eps=1e-6, mask=mask)
    assert jnp.allclose(out_tr.reshape(-1, hidden), ref_tr, atol=1e-3, rtol=1e-3), \
        "train-mode mismatch vs pure-JAX reference"

    # (3) a shape exercising the full (i, j, k) tiling (grid (2, 2, 2)) with the
    # default bf16 MXU path (f32 accumulation); the reference also casts to bf16.
    key2 = jax.random.PRNGKey(1)
    kx2, kw2, kb2, kd2 = jax.random.split(key2, 4)
    batch_l, seq_l, hidden_l = 2, 128, 256
    xl = jax.random.normal(kx2, (batch_l, seq_l, hidden_l), jnp.float32)
    wl = jax.random.normal(kw2, (hidden_l, hidden_l), jnp.float32) / jnp.sqrt(hidden_l)
    biasl = 0.5 * jax.random.normal(kb2, (hidden_l,), jnp.float32)
    a_2l = jnp.ones((hidden_l,), jnp.float32)
    b_2l = jnp.zeros((hidden_l,), jnp.float32)

    p_l = 0.1
    out_l = sublayer_connection(xl, wl, biasl, a_2l, b_2l, dropout_p=p_l, train=True,
                                dropout_key=kd2, tile_m=128, tile_n=128, tile_k=128)
    out_l = jax.block_until_ready(out_l)
    mask_l = (_keep_bits(kd2, (batch_l * seq_l, hidden_l), p_l).astype(jnp.float32)
              * (1.0 / (1.0 - p_l)))
    ref_l = _reference(xl.reshape(-1, hidden_l), wl, biasl, a_2l, b_2l, eps=1e-6,
                       mask=mask_l, mxu_dtype=jnp.bfloat16)
    assert jnp.allclose(out_l.reshape(-1, hidden_l), ref_l, atol=5e-2, rtol=5e-2), \
        "tiled-grid (bf16 MXU) mismatch vs pure-JAX reference"

    print("KERNEL_OK")
</pallas_src>

<mosaic_0001>
module attributes {stable_mosaic.version = 11 : i64} {
  func.func @_fused_sublayer_kernel(%arg0: i32, %arg1: i32, %arg2: i32, %arg3: memref<16x32xf32, #tpu.memory_space<vmem>>, %arg4: memref<32x32xf32, #tpu.memory_space<vmem>>, %arg5: memref<1x32xf32, #tpu.memory_space<vmem>>, %arg6: memref<1x32xf32, #tpu.memory_space<vmem>>, %arg7: memref<1x32xf32, #tpu.memory_space<vmem>>, %arg8: memref<16x32xf32, #tpu.memory_space<vmem>>, %arg9: memref<1x16x32xf32, #tpu.memory_space<vmem>>, %arg10: memref<1x16x32xf32, #tpu.memory_space<vmem>>, %arg11: memref<16x32xf32, #tpu.memory_space<vmem>>) attributes {dimension_semantics = [#tpu.dimension_semantics<parallel>, #tpu.dimension_semantics<arbitrary>, #tpu.dimension_semantics<arbitrary>], iteration_bounds = array<i64: 1, 1, 1>, scalar_prefetch = 0 : i64, scratch_operands = 3 : i64, tpu.core_type = #tpu.core_type<tc>, window_params = [{transform_indices = @transform_0, window_bounds = array<i64: 16, 32>}, {transform_indices = @transform_1, window_bounds = array<i64: 32, 32>}, {pipeline_mode = #tpu.pipeline_mode<synchronous>, transform_indices = @transform_2, window_bounds = array<i64: 1, 32>}, {pipeline_mode = #tpu.pipeline_mode<synchronous>, transform_indices = @transform_3, window_bounds = array<i64: 1, 32>}, {transform_indices = @transform_4, window_bounds = array<i64: 1, 32>}, {transform_indices = @transform_5, window_bounds = array<i64: 16, 32>}]} {
    %c0_i32 = arith.constant 0 : i32
    %0 = arith.cmpi eq, %arg1, %c0_i32 : i32
    %c0_i32_0 = arith.constant 0 : i32
    %1 = arith.cmpi eq, %arg2, %c0_i32_0 : i32
    %2 = arith.andi %0, %1 : i1
    %3 = arith.extui %2 : i1 to i32
    %c0_i32_1 = arith.constant 0 : i32
    %4 = arith.cmpi ne, %3, %c0_i32_1 : i32
    scf.if %4 {
      %cst_13 = arith.constant 0.000000e+00 : f32
      %19 = vector.broadcast %cst_13 : f32 to vector<16x1xf32>
      %c0_14 = arith.constant 0 : index
      %c0_15 = arith.constant 0 : index
      %20 = vector.load %arg3[%c0_14, %c0_15] : memref<16x32xf32, #tpu.memory_space<vmem>>, vector<16x32xf32>
      %cst_16 = arith.constant dense<0.000000e+00> : vector<16xf32>
      %21 = vector.multi_reduction <add>, %20, %cst_16 [1] : vector<16x32xf32> to vector<16xf32>
      %22 = vector.shape_cast %21 : vector<16xf32> to vector<16x1xf32>
      %23 = arith.addf %19, %22 : vector<16x1xf32>
      %cst_17 = arith.constant 3.125000e-02 : f32
      %24 = vector.broadcast %cst_17 : f32 to vector<16x1xf32>
      %25 = arith.mulf %23, %24 : vector<16x1xf32>
      %cst_18 = arith.constant 0.000000e+00 : f32
      %26 = vector.broadcast %cst_18 : f32 to vector<16x1xf32>
      %c0_19 = arith.constant 0 : index
      %c0_20 = arith.constant 0 : index
      %27 = vector.load %arg3[%c0_19, %c0_20] : memref<16x32xf32, #tpu.memory_space<vmem>>, vector<16x32xf32>
      %28 = vector.broadcast %25 : vector<16x1xf32> to vector<16x32xf32>
      %29 = arith.subf %27, %28 : vector<16x32xf32>
      %30 = arith.mulf %29, %29 : vector<16x32xf32>
      %cst_21 = arith.constant dense<0.000000e+00> : vector<16xf32>
      %31 = vector.multi_reduction <add>, %30, %cst_21 [1] : vector<16x32xf32> to vector<16xf32>
      %32 = vector.shape_cast %31 : vector<16xf32> to vector<16x1xf32>
      %33 = arith.addf %26, %32 : vector<16x1xf32>
      %cst_22 = arith.constant 0.0322580636 : f32
      %34 = vector.broadcast %cst_22 : f32 to vector<16x1xf32>
      %35 = arith.mulf %33, %34 : vector<16x1xf32>
      %36 = math.sqrt %35 : vector<16x1xf32>
      %cst_23 = arith.constant 9.99999997E-7 : f32
      %37 = vector.broadcast %cst_23 : f32 to vector<16x1xf32>
      %38 = arith.addf %36, %37 : vector<16x1xf32>
      %cst_24 = arith.constant 1.000000e+00 : f32
      %39 = vector.broadcast %cst_24 : f32 to vector<16x1xf32>
      %40 = arith.divf %39, %38 : vector<16x1xf32>
      %c0_25 = arith.constant 0 : index
      %c0_26 = arith.constant 0 : index
      %41 = vector.load %arg3[%c0_25, %c0_26] : memref<16x32xf32, #tpu.memory_space<vmem>>, vector<16x32xf32>
      %42 = vector.broadcast %25 : vector<16x1xf32> to vector<16x32xf32>
      %43 = arith.subf %41, %42 : vector<16x32xf32>
      %c0_27 = arith.constant 0 : index
      %c0_28 = arith.constant 0 : index
      %44 = vector.load %arg5[%c0_27, %c0_28] : memref<1x32xf32, #tpu.memory_space<vmem>>, vector<1x32xf32>
      %45 = vector.broadcast %44 : vector<1x32xf32> to vector<16x32xf32>
      %46 = arith.mulf %45, %43 : vector<16x32xf32>
      %47 = vector.broadcast %40 : vector<16x1xf32> to vector<16x32xf32>
      %48 = arith.mulf %46, %47 : vector<16x32xf32>
      %c0_29 = arith.constant 0 : index
      %c0_30 = arith.constant 0 : index
      %49 = vector.load %arg6[%c0_29, %c0_30] : memref<1x32xf32, #tpu.memory_space<vmem>>, vector<1x32xf32>
      %50 = vector.broadcast %49 : vector<1x32xf32> to vector<16x32xf32>
      %51 = arith.addf %48, %50 : vector<16x32xf32>
      %c0_31 = arith.constant 0 : index
      %c0_32 = arith.constant 0 : index
      %c0_33 = arith.constant 0 : index
      %52 = vector.load %arg9[%c0_31, %c0_32, %c0_33] : memref<1x16x32xf32, #tpu.memory_space<vmem>>, vector<1x16x32xf32>
      %53 = vector.shape_cast %52 : vector<1x16x32xf32> to vector<16x32xf32>
      %54 = vector.shape_cast %51 : vector<16x32xf32> to vector<1x16x32xf32>
      tpu.vector_store %arg9[%c0_31, %c0_32, %c0_33], %54 {strides = array<i32>} : memref<1x16x32xf32, #tpu.memory_space<vmem>>, vector<1x16x32xf32>,
      %c0_34 = arith.constant 0 : index
      %c0_35 = arith.constant 0 : index
      %55 = vector.load %arg3[%c0_34, %c0_35] : memref<16x32xf32, #tpu.memory_space<vmem>>, vector<16x32xf32>
      %c0_36 = arith.constant 0 : index
      %c0_37 = arith.constant 0 : index
      %c0_38 = arith.constant 0 : index
      %56 = vector.load %arg10[%c0_36, %c0_37, %c0_38] : memref<1x16x32xf32, #tpu.memory_space<vmem>>, vector<1x16x32xf32>
      %57 = vector.shape_cast %56 : vector<1x16x32xf32> to vector<16x32xf32>
      %58 = vector.shape_cast %55 : vector<16x32xf32> to vector<1x16x32xf32>
      tpu.vector_store %arg10[%c0_36, %c0_37, %c0_38], %58 {strides = array<i32>} : memref<1x16x32xf32, #tpu.memory_space<vmem>>, vector<1x16x32xf32>,
    } else {
    }
    %c0_i32_2 = arith.constant 0 : i32
    %5 = arith.cmpi eq, %arg2, %c0_i32_2 : i32
    %6 = arith.extui %5 : i1 to i32
    %c0_i32_3 = arith.constant 0 : i32
    %7 = arith.cmpi ne, %6, %c0_i32_3 : i32
    scf.if %7 {
      %cst_13 = arith.constant 0.000000e+00 : f32
      %19 = vector.broadcast %cst_13 : f32 to vector<16x32xf32>
      %c0_14 = arith.constant 0 : index
      %c0_15 = arith.constant 0 : index
      %20 = vector.load %arg11[%c0_14, %c0_15] : memref<16x32xf32, #tpu.memory_space<vmem>>, vector<16x32xf32>
      tpu.vector_store %arg11[%c0_14, %c0_15], %19 {strides = array<i32>} : memref<16x32xf32, #tpu.memory_space<vmem>>, vector<16x32xf32>,
    } else {
    }
    %c0 = arith.constant 0 : index
    %c0_4 = arith.constant 0 : index
    %8 = vector.load %arg11[%c0, %c0_4] : memref<16x32xf32, #tpu.memory_space<vmem>>, vector<16x32xf32>
    %9 = arith.index_cast %arg2 : i32 to index
    %c0_5 = arith.constant 0 : index
    %c0_6 = arith.constant 0 : index
    %10 = vector.load %arg9[%9, %c0_5, %c0_6] : memref<1x16x32xf32, #tpu.memory_space<vmem>>, vector<1x16x32xf32>
    %11 = vector.shape_cast %10 : vector<1x16x32xf32> to vector<16x32xf32>
    %c0_7 = arith.constant 0 : index
    %c0_8 = arith.constant 0 : index
    %12 = vector.load %arg4[%c0_7, %c0_8] : memref<32x32xf32, #tpu.memory_space<vmem>>, vector<32x32xf32>
    %cst = arith.constant dense<0.000000e+00> : vector<16x32xf32>
    %13 = tpu.matmul %11, %12, %cst {dimension_numbers = #tpu.dot_dimension_numbers<[1], [0], [0], [1], [0, 0, 1, 1], [], []>, precision = #tpu.contract_precision<fp32>} : vector<16x32xf32>, vector<32x32xf32>, vector<16x32xf32> -> vector<16x32xf32>
    %14 = arith.addf %8, %13 : vector<16x32xf32>
    %c0_9 = arith.constant 0 : index
    %c0_10 = arith.constant 0 : index
    %15 = vector.load %arg11[%c0_9, %c0_10] : memref<16x32xf32, #tpu.memory_space<vmem>>, vector<16x32xf32>
    tpu.vector_store %arg11[%c0_9, %c0_10], %14 {strides = array<i32>} : memref<16x32xf32, #tpu.memory_space<vmem>>, vector<16x32xf32>,
    %c0_i32_11 = arith.constant 0 : i32
    %16 = arith.cmpi eq, %arg2, %c0_i32_11 : i32
    %17 = arith.extui %16 : i1 to i32
    %c0_i32_12 = arith.constant 0 : i32
    %18 = arith.cmpi ne, %17, %c0_i32_12 : i32
    scf.if %18 {
      %c0_13 = arith.constant 0 : index
      %c0_14 = arith.constant 0 : index
      %19 = vector.load %arg11[%c0_13, %c0_14] : memref<16x32xf32, #tpu.memory_space<vmem>>, vector<16x32xf32>
      %c0_15 = arith.constant 0 : index
      %c0_16 = arith.constant 0 : index
      %20 = vector.load %arg7[%c0_15, %c0_16] : memref<1x32xf32, #tpu.memory_space<vmem>>, vector<1x32xf32>
      %21 = vector.broadcast %20 : vector<1x32xf32> to vector<16x32xf32>
      %22 = arith.addf %19, %21 : vector<16x32xf32>
      %23 = arith.index_cast %arg1 : i32 to index
      %c0_17 = arith.constant 0 : index
      %c0_18 = arith.constant 0 : index
      %24 = vector.load %arg10[%23, %c0_17, %c0_18] : memref<1x16x32xf32, #tpu.memory_space<vmem>>, vector<1x16x32xf32>
      %25 = vector.shape_cast %24 : vector<1x16x32xf32> to vector<16x32xf32>
      %26 = arith.addf %25, %22 : vector<16x32xf32>
      %c0_19 = arith.constant 0 : index
      %c0_20 = arith.constant 0 : index
      %27 = vector.load %arg8[%c0_19, %c0_20] : memref<16x32xf32, #tpu.memory_space<vmem>>, vector<16x32xf32>
      tpu.vector_store %arg8[%c0_19, %c0_20], %26 {strides = array<i32>} : memref<16x32xf32, #tpu.memory_space<vmem>>, vector<16x32xf32>,
    } else {
    }
    return
  }
  func.func @transform_0(%arg0: i32, %arg1: i32, %arg2: i32) -> (i32, i32) {
    %c0_i32 = arith.constant 0 : i32
    %c0_i32_0 = arith.constant 0 : i32
    return %arg0, %c0_i32 : i32, i32
  }
  func.func @transform_1(%arg0: i32, %arg1: i32, %arg2: i32) -> (i32, i32) {
    %c0_i32 = arith.constant 0 : i32
    return %arg2, %arg1 : i32, i32
  }
  func.func @transform_2(%arg0: i32, %arg1: i32, %arg2: i32) -> (i32, i32) {
    %c0_i32 = arith.constant 0 : i32
    %c0_i32_0 = arith.constant 0 : i32
    %c0_i32_1 = arith.constant 0 : i32
    return %c0_i32, %c0_i32_0 : i32, i32
  }
  func.func @transform_3(%arg0: i32, %arg1: i32, %arg2: i32) -> (i32, i32) {
    %c0_i32 = arith.constant 0 : i32
    %c0_i32_0 = arith.constant 0 : i32
    %c0_i32_1 = arith.constant 0 : i32
    return %c0_i32, %c0_i32_0 : i32, i32
  }
  func.func @transform_4(%arg0: i32, %arg1: i32, %arg2: i32) -> (i32, i32) {
    %c0_i32 = arith.constant 0 : i32
    %c0_i32_0 = arith.constant 0 : i32
    return %c0_i32, %arg1 : i32, i32
  }
  func.func @transform_5(%arg0: i32, %arg1: i32, %arg2: i32) -> (i32, i32) {
    %c0_i32 = arith.constant 0 : i32
    return %arg0, %arg1 : i32, i32
  }
}

</mosaic_0001>

<llo_original>
// kernel: tpu_custom_call.1
$region0: #{tpu_custom_call.1}
  #allocation0 [shape = 'u32[]', space=smem, size = 0x4, offset = 0x4, fixed_abs, tag = 'smem constant byte address 0x4 - core index']
  #allocation1 [shape = 'u32[144,128]{1,0:T(1,128)}', space=vmem, size = 0x12000, scoped, tag = 'internal scratch']
  #allocation2 [shape = 'f32[1,16,32]{2,1,0:T(8,128)}', space=vmem, size = 0x2000, scoped, tag = 'scratch operand']
  #allocation3 [shape = 'f32[1,16,32]{2,1,0:T(8,128)}', space=vmem, size = 0x2000, scoped, tag = 'scratch operand']
  #allocation4 [shape = 'f32[16,32]{1,0:T(8,128)}', space=vmem, size = 0x2000, scoped, tag = 'scratch operand']
  %s0 = inlined_call_operand.hbm [shape: f32[16,32], index: 0, kind: input, shape index: {}]
  %s1 = inlined_call_operand.hbm [shape: f32[32,32], index: 1, kind: input, shape index: {}]
  %s2 = inlined_call_operand.vmem [shape: f32[1,32], index: 2, kind: input, shape index: {}]
  %s3 = inlined_call_operand.vmem [shape: f32[1,32], index: 3, kind: input, shape index: {}]
  %s4 = inlined_call_operand.vmem [shape: f32[1,32], index: 4, kind: input, shape index: {}]
  %s5 = inlined_call_operand.hbm [shape: f32[16,32], index: 5, kind: output, shape index: {}]
  %s6 = sld [smem:[#allocation0]]
  $region50: #{tpu_custom_call.1} parent=0
    _
  %s8 = ssub.s32 1, %s6
  %s9 = scalar_select 0, %s8, %s6
  $region1: #{tpu_custom_call.1} parent=0
    #allocation5 [shape = 'u8[8192]{0}', space=vmem, size = 0x2000, scoped, tag = 'input window, operand 0, single buffered']
    #allocation6 [shape = 's32[1]{0}', space=sflag, size = 0x4, scoped, tag = 'scoped memory for tpu_custom_call.1']
    #allocation7 [shape = 's32[1]{0}', space=sflag, size = 0x4, scoped, tag = 'scoped memory for tpu_custom_call.1']
    #allocation8 [shape = 'u8[16384]{0}', space=vmem, size = 0x4000, scoped, tag = 'input window, operand 1, single buffered']
    #allocation9 [shape = 's32[1]{0}', space=sflag, size = 0x4, scoped, tag = 'scoped memory for tpu_custom_call.1']
    #allocation10 [shape = 'u8[8192]{0}', space=vmem, size = 0x2000, scoped, tag = 'output window, operand 0, single buffered']
    %10 = vsyncpa [#allocation6], 0
    %11 = vsyncpa [#allocation9], 0
    %12 = vsyncpa [#allocation7], 0
    // Predicated region
    $region2: #{tpu_custom_call.1} parent=1 // pred_check
      _
    $region3: #{tpu_custom_call.1} parent=1 // pred_check_branch
      %14 = sbr.rel (0) target = $region5
    $region4: #{tpu_custom_call.1} parent=1 // pred_region
      %s16 = ssub.s32 256, 256
      %17 = vsyncadd [#allocation6], %s16
      %s18 = sshll.u32 [#allocation5], 4
      %s19 = int_to_ptr.vmem [resolvable:$true] %s18
      %24 = dma.hbm_to_vmem [thread:$0]  %s0, 256, %s19, [#allocation6], 128, 128, 8
    $region5: #{tpu_custom_call.1} parent=1 // pred_fallthru
      _
    // Predicated region
    $region6: #{tpu_custom_call.1} parent=1 // pred_check
      _
    $region7: #{tpu_custom_call.1} parent=1 // pred_check_branch
      %26 = sbr.rel (0) target = $region9
    $region8: #{tpu_custom_call.1} parent=1 // pred_region
      %s28 = ssub.s32 512, 512
      %29 = vsyncadd [#allocation9], %s28
      %s30 = sshll.u32 [#allocation8], 4
      %s31 = int_to_ptr.vmem [resolvable:$true] %s30
      %36 = dma.hbm_to_vmem [thread:$0]  %s1, 512, %s31, [#allocation9], 128, 128, 8
    $region9: #{tpu_custom_call.1} parent=1 // pred_fallthru
      _
    // Predicated region
    $region10: #{tpu_custom_call.1} parent=1 // pred_check
      _
    $region11: #{tpu_custom_call.1} parent=1 // pred_check_branch
      %38 = sbr.rel (0) target = $region13
    $region12: #{tpu_custom_call.1} parent=1 // pred_region
      _
    $region13: #{tpu_custom_call.1} parent=1 // pred_fallthru
      _
    // Predicated region
    $region14: #{tpu_custom_call.1} parent=1 // pred_check
      _
    $region15: #{tpu_custom_call.1} parent=1 // pred_check_branch
      %40 = sbr.rel (0) target = $region17
    $region16: #{tpu_custom_call.1} parent=1 // pred_region
      _
    $region17: #{tpu_custom_call.1} parent=1 // pred_fallthru
      _
    // Predicated region
    $region18: #{tpu_custom_call.1} parent=1 // pred_check
      _
    $region19: #{tpu_custom_call.1} parent=1 // pred_check_branch
      %42 = sbr.rel (0) target = $region21
    $region20: #{tpu_custom_call.1} parent=1 // pred_region
      _
    $region21: #{tpu_custom_call.1} parent=1 // pred_fallthru
      _
    // Predicated region
    $region22: #{tpu_custom_call.1} parent=1 // pred_check
      _
    $region23: #{tpu_custom_call.1} parent=1 // pred_check_branch
      %44 = sbr.rel (0) target = $region25
    $region24: #{tpu_custom_call.1} parent=1 // pred_region
      %45 = dma.done [#allocation6], 256
    $region25: #{tpu_custom_call.1} parent=1 // pred_fallthru
      _
    // Predicated region
    $region26: #{tpu_custom_call.1} parent=1 // pred_check
      _
    $region27: #{tpu_custom_call.1} parent=1 // pred_check_branch
      %47 = sbr.rel (0) target = $region29
    $region28: #{tpu_custom_call.1} parent=1 // pred_region
      %48 = dma.done [#allocation9], 512
    $region29: #{tpu_custom_call.1} parent=1 // pred_fallthru
      _
    %p49 = scmp.eq.s32.totalorder 0, 0
    %p50 = scmp.eq.s32.totalorder 0, 0
    %p51 = pnand %p49, %p50
    %p52 = pneg %p51
    // Predicated region
    $region30: #{tpu_custom_call.1} parent=1 // pred_check
      _
    $region31: #{tpu_custom_call.1} parent=1 // pred_check_branch
      %54 = sbr.rel (%p51) target = $region33
    $region32: #{tpu_custom_call.1} parent=1 // pred_region
      %v55 = vld [vmem:[#allocation5] sm:$0xff]
      %v56 = vld [vmem:[#allocation5 + $0x8] sm:$0xff]
      %vm57 = vcmask 261120
      %v58 = vsel %vm57, %v55, 0.0
      %59 = vadd.xlane.f32.xlu0 %v58
      %v60 = vpop.xlane.xlu0 %59
      %v61 = vsel %vm57, %v56, 0.0
      %62 = vadd.xlane.f32.xlu0 %v61
      %v63 = vpop.xlane.xlu0 %62
      %v64 = vadd.f32 %v60, 0.0
      %v65 = vadd.f32 %v63, 0.0
      %v66 = vmul.f32 %v64, 0.03125
      %v67 = vmul.f32 %v65, 0.03125
      %v68 = vsub.f32 %v55, %v66
      %v69 = vsub.f32 %v56, %v67
      %v70 = vmul.f32 %v68, %v68
      %v71 = vmul.f32 %v69, %v69
      %v72 = vsel %vm57, %v70, 0.0
      %73 = vadd.xlane.f32.xlu0 %v72
      %v74 = vpop.xlane.xlu0 %73
      %v75 = vsel %vm57, %v71, 0.0
      %76 = vadd.xlane.f32.xlu0 %v75
      %v77 = vpop.xlane.xlu0 %76
      %v78 = vadd.f32 %v74, 0.0
      %v79 = vadd.f32 %v77, 0.0
      %v80 = vmul.f32 %v78, 0.032258064
      %v81 = vmul.f32 %v79, 0.032258064
      %v82 = vrsqrt.pop %v80
      %v83 = vmul.f32 %v80, %v82
      %vm84 = vcmp.eq.f32.partialorder %v80, inf
      %v85 = vsel %vm84, %v80, %v83
      %vm86 = vcmp.eq.f32.partialorder %v80, 0.0
      %v87 = vand.u32 %v80, 2147483648
      %v88 = vsel %vm86, %v87, %v85
      %v89 = vrsqrt.pop %v81
      %v90 = vmul.f32 %v81, %v89
      %vm91 = vcmp.eq.f32.partialorder %v81, inf
      %v92 = vsel %vm91, %v81, %v90
      %vm93 = vcmp.eq.f32.partialorder %v81, 0.0
      %v94 = vand.u32 %v81, 2147483648
      %v95 = vsel %vm93, %v94, %v92
      %v96 = vadd.f32 %v88, 1e-06
      %v97 = vadd.f32 %v95, 1e-06
      %v98 = vrcp.pop %v96
      %v99 = vmul.f32 1.0, %v98
      %v100 = vrcp.pop %v97
      %v101 = vmul.f32 1.0, %v100
      %v102 = vld [vmem:[%s2] sm:$0x1]
      %v104 = vlaneseq
      %v105 = vshrl.u32 %v104, 7
      %v106 = vsub.s32 0, %v105
      %v107 = vrot.slane %v102, %v106
      %v109 = vmul.f32 %v107, %v68
      %v110 = vmul.f32 %v107, %v69
      %v111 = vmul.f32 %v109, %v99
      %v112 = vmul.f32 %v110, %v101
      %v113 = vld [vmem:[%s3] sm:$0x1]
      %v115 = vlaneseq
      %v116 = vshrl.u32 %v115, 7
      %v117 = vsub.s32 0, %v116
      %v118 = vrot.slane %v113, %v117
      %v120 = vadd.f32 %v111, %v118
      %v121 = vadd.f32 %v112, %v118
      %122 = vst.msk [vmem:[#allocation2] sm:$0xff] %vm57, %v120
      %123 = vst.msk [vmem:[#allocation2 + $0x8] sm:$0xff] %vm57, %v121
      %v124 = vld [vmem:[#allocation5] sm:$0xff]
      %v125 = vld [vmem:[#allocation5 + $0x8] sm:$0xff]
      %126 = vst.msk [vmem:[#allocation3] sm:$0xff] %vm57, %v124
      %127 = vst.msk [vmem:[#allocation3 + $0x8] sm:$0xff] %vm57, %v125
    $region33: #{tpu_custom_call.1} parent=1 // pred_fallthru
      _
    // Predicated region
    $region34: #{tpu_custom_call.1} parent=1 // pred_check
      %p128 = pneg %p50
    $region35: #{tpu_custom_call.1} parent=1 // pred_check_branch
      %130 = sbr.rel (%p128) target = $region37
    $region36: #{tpu_custom_call.1} parent=1 // pred_region
      %vm131 = vcmask 261120
      %132 = vst.msk [vmem:[#allocation4] sm:$0xff] %vm131, 0.0
      %133 = vst.msk [vmem:[#allocation4 + $0x8] sm:$0xff] %vm131, 0.0
    $region37: #{tpu_custom_call.1} parent=1 // pred_fallthru
      _
    %v134 = vld [vmem:[#allocation4] sm:$0xff]
    %v135 = vld [vmem:[#allocation4 + $0x8] sm:$0xff]
    %s136 = smul.u32 0, 16
    %s137 = scalar_lea.vmem [#allocation2], %s136
    %v138 = vld [vmem:[%s137] sm:$0xff]
    %v139 = vld [vmem:[%s137 + $0x8] sm:$0xff]
    %v140 = vld [vmem:[#allocation8] sm:$0xff]
    %v141 = vld [vmem:[#allocation8 + $0x8] sm:$0xff]
    %v142 = vld [vmem:[#allocation8 + $0x10] sm:$0xff]
    %v143 = vld [vmem:[#allocation8 + $0x18] sm:$0xff]
    %vm144 = vcmask 261120
    %v146 = vsel %vm144, %v138, 0
    %v149 = vsel %vm144, %v139, 0
    %151 = vmatprep.subr.mxu0 0.0
    %v152 = vand.u32 %v140, 4294901760
    %153 = vmatpush1.msra.mxu0 %v152
    %154 = vmatprep.subr.mxu0 0.0
    %v155 = vand.u32 %v141, 4294901760
    %156 = vmatpush1.msra.mxu0 %v155
    %157 = vmatprep.subr.mxu0 0.0
    %v158 = vand.u32 %v142, 4294901760
    %159 = vmatpush1.msra.mxu0 %v158
    %160 = vmatprep.subr.mxu0 0.0
    %v161 = vand.u32 %v143, 4294901760
    %162 = vmatpush1.msra.mxu0 %v161
    %163 = vmatprep.subr.mxu0 0.0
    %164 = vmatpush1.msra.mxu0 0.0
    %165 = vmatprep.subr.mxu0 0.0
    %166 = vmatpush1.msra.mxu0 0.0
    %167 = vmatprep.subr.mxu0 0.0
    %168 = vmatpush1.msra.mxu0 0.0
    %169 = vmatprep.subr.mxu0 0.0
    %170 = vmatpush1.msra.mxu0 0.0
    %171 = vmatprep.subr.mxu0 0.0
    %172 = vmatpush1.msra.mxu0 0.0
    %173 = vmatprep.subr.mxu0 0.0
    %174 = vmatpush1.msra.mxu0 0.0
    %175 = vmatprep.subr.mxu0 0.0
    %176 = vmatpush1.msra.mxu0 0.0
    %177 = vmatprep.subr.mxu0 0.0
    %178 = vmatpush1.msra.mxu0 0.0
    %179 = vmatprep.subr.mxu0 0.0
    %180 = vmatpush1.msra.mxu0 0.0
    %181 = vmatprep.subr.mxu0 0.0
    %182 = vmatpush1.msra.mxu0 0.0
    %183 = vmatprep.subr.mxu0 0.0
    %184 = vmatpush1.msra.mxu0 0.0
    %185 = vmatprep.subr.mxu0 0.0
    %186 = vmatpush1.msra.mxu0 0.0
    %187 = vmatprep.subr.mxu0 0.0
    %188 = vmatpush1.msra.mxu0 0.0
    %189 = vmatprep.subr.mxu0 0.0
    %190 = vmatpush1.msra.mxu0 0.0
    %191 = vmatprep.subr.mxu0 0.0
    %192 = vmatpush1.msra.mxu0 0.0
    %193 = vmatprep.subr.mxu0 0.0
    %194 = vmatpush1.msra.mxu0 0.0
    %195 = vmatprep.subr.mxu0 0.0
    %196 = vmatpush1.msra.mxu0 0.0
    %197 = vmatprep.subr.mxu0 0.0
    %198 = vmatpush1.msra.mxu0 0.0
    %199 = vmatprep.subr.mxu0 0.0
    %200 = vmatpush1.msra.mxu0 0.0
    %201 = vmatprep.subr.mxu0 0.0
    %202 = vmatpush1.msra.mxu0 0.0
    %203 = vmatprep.subr.mxu0 0.0
    %204 = vmatpush1.msra.mxu0 0.0
    %205 = vmatprep.subr.mxu0 0.0
    %206 = vmatpush1.msra.mxu0 0.0
    %207 = vmatprep.subr.mxu0 0.0
    %208 = vmatpush1.msra.mxu0 0.0
    %209 = vmatprep.subr.mxu0 0.0
    %210 = vmatpush1.msra.mxu0 0.0
    %211 = vmatprep.subr.mxu0 0.0
    %212 = vmatpush1.msra.mxu0 0.0
    %213 = vmatprep.subr.mxu0 0.0
    %214 = vmatpush1.msra.mxu0 0.0
    %215 = vmatprep.subr.mxu0 0.0
    %216 = vmatpush1.msra.mxu0 0.0
    %217 = vmatprep.subr.mxu0 0.0
    %218 = vmatpush1.msra.mxu0 0.0
    %219 = vmatprep.mubr.f32.mxu0 0.0
    %v220 = vand.u32 %v146, 4294901760
    %v221 = vsub.f32 %v146, %v220
    %v222 = vand.u32 %v221, 4294901760
    %v223 = vsub.f32 %v221, %v222
    %v224 = vand.u32 %v223, 4294901760
    %225 = vmatmul.mubr.f32.gmra.mrb[0].mxu0 %v224
    %v226 = vpop.f32.mrb[0].mxu0
    %v227 = vadd.f32 0.0, %v226
    %v228 = vpop.f32.mrb[0].mxu0
    %229 = vmatprep.mubr.f32.mxu0 0.0
    %v230 = vand.u32 %v149, 4294901760
    %v231 = vsub.f32 %v149, %v230
    %v232 = vand.u32 %v231, 4294901760
    %v233 = vsub.f32 %v231, %v232
    %v234 = vand.u32 %v233, 4294901760
    %235 = vmatmul.mubr.f32.gmra.mrb[0].mxu0 %v234
    %v236 = vpop.f32.mrb[0].mxu0
    %v237 = vadd.f32 0.0, %v236
    %v238 = vpop.f32.mrb[0].mxu0
    %239 = vdwg.mxu0
    %240 = vmatprep.subr.mxu0 0.0
    %v241 = vand.u32 %v140, 4294901760
    %v242 = vsub.f32 %v140, %v241
    %v243 = vand.u32 %v242, 4294901760
    %v244 = vsub.f32 %v242, %v243
    %v245 = vand.u32 %v244, 4294901760
    %246 = vmatpush1.msra.mxu0 %v245
    %247 = vmatprep.subr.mxu0 0.0
    %v248 = vand.u32 %v141, 4294901760
    %v249 = vsub.f32 %v141, %v248
    %v250 = vand.u32 %v249, 4294901760
    %v251 = vsub.f32 %v249, %v250
    %v252 = vand.u32 %v251, 4294901760
    %253 = vmatpush1.msra.mxu0 %v252
    %254 = vmatprep.subr.mxu0 0.0
    %v255 = vand.u32 %v142, 4294901760
    %v256 = vsub.f32 %v142, %v255
    %v257 = vand.u32 %v256, 4294901760
    %v258 = vsub.f32 %v256, %v257
    %v259 = vand.u32 %v258, 4294901760
    %260 = vmatpush1.msra.mxu0 %v259
    %261 = vmatprep.subr.mxu0 0.0
    %v262 = vand.u32 %v143, 4294901760
    %v263 = vsub.f32 %v143, %v262
    %v264 = vand.u32 %v263, 4294901760
    %v265 = vsub.f32 %v263, %v264
    %v266 = vand.u32 %v265, 4294901760
    %267 = vmatpush1.msra.mxu0 %v266
    %268 = vmatprep.subr.mxu0 0.0
    %269 = vmatpush1.msra.mxu0 0.0
    %270 = vmatprep.subr.mxu0 0.0
    %271 = vmatpush1.msra.mxu0 0.0
    %272 = vmatprep.subr.mxu0 0.0
    %273 = vmatpush1.msra.mxu0 0.0
    %274 = vmatprep.subr.mxu0 0.0
    %275 = vmatpush1.msra.mxu0 0.0
    %276 = vmatprep.subr.mxu0 0.0
    %277 = vmatpush1.msra.mxu0 0.0
    %278 = vmatprep.subr.mxu0 0.0
    %279 = vmatpush1.msra.mxu0 0.0
    %280 = vmatprep.subr.mxu0 0.0
    %281 = vmatpush1.msra.mxu0 0.0
    %282 = vmatprep.subr.mxu0 0.0
    %283 = vmatpush1.msra.mxu0 0.0
    %284 = vmatprep.subr.mxu0 0.0
    %285 = vmatpush1.msra.mxu0 0.0
    %286 = vmatprep.subr.mxu0 0.0
    %287 = vmatpush1.msra.mxu0 0.0
    %288 = vmatprep.subr.mxu0 0.0
    %289 = vmatpush1.msra.mxu0 0.0
    %290 = vmatprep.subr.mxu0 0.0
    %291 = vmatpush1.msra.mxu0 0.0
    %292 = vmatprep.subr.mxu0 0.0
    %293 = vmatpush1.msra.mxu0 0.0
    %294 = vmatprep.subr.mxu0 0.0
    %295 = vmatpush1.msra.mxu0 0.0
    %296 = vmatprep.subr.mxu0 0.0
    %297 = vmatpush1.msra.mxu0 0.0
    %298 = vmatprep.subr.mxu0 0.0
    %299 = vmatpush1.msra.mxu0 0.0
    %300 = vmatprep.subr.mxu0 0.0
    %301 = vmatpush1.msra.mxu0 0.0
    %302 = vmatprep.subr.mxu0 0.0
    %303 = vmatpush1.msra.mxu0 0.0
    %304 = vmatprep.subr.mxu0 0.0
    %305 = vmatpush1.msra.mxu0 0.0
    %306 = vmatprep.subr.mxu0 0.0
    %307 = vmatpush1.msra.mxu0 0.0
    %308 = vmatprep.subr.mxu0 0.0
    %309 = vmatpush1.msra.mxu0 0.0
    %310 = vmatprep.subr.mxu0 0.0
    %311 = vmatpush1.msra.mxu0 0.0
    %312 = vmatprep.subr.mxu0 0.0
    %313 = vmatpush1.msra.mxu0 0.0
    %314 = vmatprep.subr.mxu0 0.0
    %315 = vmatpush1.msra.mxu0 0.0
    %316 = vmatprep.subr.mxu0 0.0
    %317 = vmatpush1.msra.mxu0 0.0
    %318 = vmatprep.subr.mxu0 0.0
    %319 = vmatpush1.msra.mxu0 0.0
    %320 = vmatprep.subr.mxu0 0.0
    %321 = vmatpush1.msra.mxu0 0.0
    %322 = vmatprep.subr.mxu0 0.0
    %323 = vmatpush1.msra.mxu0 0.0
    %324 = vmatprep.mubr.f32.mxu0 0.0
    %v325 = vand.u32 %v146, 4294901760
    %326 = vmatmul.mubr.f32.gmra.mrb[0].mxu0 %v325
    %v327 = vpop.f32.mrb[0].mxu0
    %v328 = vadd.f32 %v227, %v327
    %v329 = vpop.f32.mrb[0].mxu0
    %330 = vmatprep.mubr.f32.mxu0 0.0
    %v331 = vand.u32 %v149, 4294901760
    %332 = vmatmul.mubr.f32.gmra.mrb[0].mxu0 %v331
    %v333 = vpop.f32.mrb[0].mxu0
    %v334 = vadd.f32 %v237, %v333
    %v335 = vpop.f32.mrb[0].mxu0
    %336 = vdwg.mxu0
    %337 = vmatprep.subr.mxu0 0.0
    %v338 = vand.u32 %v140, 4294901760
    %v339 = vsub.f32 %v140, %v338
    %340 = vmatpush1.msra.mxu0 %v339
    %341 = vmatprep.subr.mxu0 0.0
    %v342 = vand.u32 %v141, 4294901760
    %v343 = vsub.f32 %v141, %v342
    %344 = vmatpush1.msra.mxu0 %v343
    %345 = vmatprep.subr.mxu0 0.0
    %v346 = vand.u32 %v142, 4294901760
    %v347 = vsub.f32 %v142, %v346
    %348 = vmatpush1.msra.mxu0 %v347
    %349 = vmatprep.subr.mxu0 0.0
    %v350 = vand.u32 %v143, 4294901760
    %v351 = vsub.f32 %v143, %v350
    %352 = vmatpush1.msra.mxu0 %v351
    %353 = vmatprep.subr.mxu0 0.0
    %354 = vmatpush1.msra.mxu0 0.0
    %355 = vmatprep.subr.mxu0 0.0
    %356 = vmatpush1.msra.mxu0 0.0
    %357 = vmatprep.subr.mxu0 0.0
    %358 = vmatpush1.msra.mxu0 0.0
    %359 = vmatprep.subr.mxu0 0.0
    %360 = vmatpush1.msra.mxu0 0.0
    %361 = vmatprep.subr.mxu0 0.0
    %362 = vmatpush1.msra.mxu0 0.0
    %363 = vmatprep.subr.mxu0 0.0
    %364 = vmatpush1.msra.mxu0 0.0
    %365 = vmatprep.subr.mxu0 0.0
    %366 = vmatpush1.msra.mxu0 0.0
    %367 = vmatprep.subr.mxu0 0.0
    %368 = vmatpush1.msra.mxu0 0.0
    %369 = vmatprep.subr.mxu0 0.0
    %370 = vmatpush1.msra.mxu0 0.0
    %371 = vmatprep.subr.mxu0 0.0
    %372 = vmatpush1.msra.mxu0 0.0
    %373 = vmatprep.subr.mxu0 0.0
    %374 = vmatpush1.msra.mxu0 0.0
    %375 = vmatprep.subr.mxu0 0.0
    %376 = vmatpush1.msra.mxu0 0.0
    %377 = vmatprep.subr.mxu0 0.0
    %378 = vmatpush1.msra.mxu0 0.0
    %379 = vmatprep.subr.mxu0 0.0
    %380 = vmatpush1.msra.mxu0 0.0
    %381 = vmatprep.subr.mxu0 0.0
    %382 = vmatpush1.msra.mxu0 0.0
    %383 = vmatprep.subr.mxu0 0.0
    %384 = vmatpush1.msra.mxu0 0.0
    %385 = vmatprep.subr.mxu0 0.0
    %386 = vmatpush1.msra.mxu0 0.0
    %387 = vmatprep.subr.mxu0 0.0
    %388 = vmatpush1.msra.mxu0 0.0
    %389 = vmatprep.subr.mxu0 0.0
    %390 = vmatpush1.msra.mxu0 0.0
    %391 = vmatprep.subr.mxu0 0.0
    %392 = vmatpush1.msra.mxu0 0.0
    %393 = vmatprep.subr.mxu0 0.0
    %394 = vmatpush1.msra.mxu0 0.0
    %395 = vmatprep.subr.mxu0 0.0
    %396 = vmatpush1.msra.mxu0 0.0
    %397 = vmatprep.subr.mxu0 0.0
    %398 = vmatpush1.msra.mxu0 0.0
    %399 = vmatprep.subr.mxu0 0.0
    %400 = vmatpush1.msra.mxu0 0.0
    %401 = vmatprep.subr.mxu0 0.0
    %402 = vmatpush1.msra.mxu0 0.0
    %403 = vmatprep.subr.mxu0 0.0
    %404 = vmatpush1.msra.mxu0 0.0
    %405 = vmatprep.subr.mxu0 0.0
    %406 = vmatpush1.msra.mxu0 0.0
    %407 = vmatprep.subr.mxu0 0.0
    %408 = vmatpush1.msra.mxu0 0.0
    %409 = vmatprep.mubr.f32.mxu0 0.0
    %v410 = vand.u32 %v146, 4294901760
    %v411 = vsub.f32 %v146, %v410
    %412 = vmatmul.mubr.f32.gmra.mrb[0].mxu0 %v411
    %v413 = vpop.f32.mrb[0].mxu0
    %v414 = vadd.f32 %v328, %v413
    %v415 = vpop.f32.mrb[0].mxu0
    %416 = vmatprep.mubr.f32.mxu0 0.0
    %v417 = vand.u32 %v149, 4294901760
    %v418 = vsub.f32 %v149, %v417
    %419 = vmatmul.mubr.f32.gmra.mrb[0].mxu0 %v418
    %v420 = vpop.f32.mrb[0].mxu0
    %v421 = vadd.f32 %v334, %v420
    %v422 = vpop.f32.mrb[0].mxu0
    %423 = vdwg.mxu0
    %424 = vmatprep.subr.mxu0 0.0
    %v425 = vand.u32 %v140, 4294901760
    %426 = vmatpush1.msra.mxu0 %v425
    %427 = vmatprep.subr.mxu0 0.0
    %v428 = vand.u32 %v141, 4294901760
    %429 = vmatpush1.msra.mxu0 %v428
    %430 = vmatprep.subr.mxu0 0.0
    %v431 = vand.u32 %v142, 4294901760
    %432 = vmatpush1.msra.mxu0 %v431
    %433 = vmatprep.subr.mxu0 0.0
    %v434 = vand.u32 %v143, 4294901760
    %435 = vmatpush1.msra.mxu0 %v434
    %436 = vmatprep.subr.mxu0 0.0
    %437 = vmatpush1.msra.mxu0 0.0
    %438 = vmatprep.subr.mxu0 0.0
    %439 = vmatpush1.msra.mxu0 0.0
    %440 = vmatprep.subr.mxu0 0.0
    %441 = vmatpush1.msra.mxu0 0.0
    %442 = vmatprep.subr.mxu0 0.0
    %443 = vmatpush1.msra.mxu0 0.0
    %444 = vmatprep.subr.mxu0 0.0
    %445 = vmatpush1.msra.mxu0 0.0
    %446 = vmatprep.subr.mxu0 0.0
    %447 = vmatpush1.msra.mxu0 0.0
    %448 = vmatprep.subr.mxu0 0.0
    %449 = vmatpush1.msra.mxu0 0.0
    %450 = vmatprep.subr.mxu0 0.0
    %451 = vmatpush1.msra.mxu0 0.0
    %452 = vmatprep.subr.mxu0 0.0
    %453 = vmatpush1.msra.mxu0 0.0
    %454 = vmatprep.subr.mxu0 0.0
    %455 = vmatpush1.msra.mxu0 0.0
    %456 = vmatprep.subr.mxu0 0.0
    %457 = vmatpush1.msra.mxu0 0.0
    %458 = vmatprep.subr.mxu0 0.0
    %459 = vmatpush1.msra.mxu0 0.0
    %460 = vmatprep.subr.mxu0 0.0
    %461 = vmatpush1.msra.mxu0 0.0
    %462 = vmatprep.subr.mxu0 0.0
    %463 = vmatpush1.msra.mxu0 0.0
    %464 = vmatprep.subr.mxu0 0.0
    %465 = vmatpush1.msra.mxu0 0.0
    %466 = vmatprep.subr.mxu0 0.0
    %467 = vmatpush1.msra.mxu0 0.0
    %468 = vmatprep.subr.mxu0 0.0
    %469 = vmatpush1.msra.mxu0 0.0
    %470 = vmatprep.subr.mxu0 0.0
    %471 = vmatpush1.msra.mxu0 0.0
    %472 = vmatprep.subr.mxu0 0.0
    %473 = vmatpush1.msra.mxu0 0.0
    %474 = vmatprep.subr.mxu0 0.0
    %475 = vmatpush1.msra.mxu0 0.0
    %476 = vmatprep.subr.mxu0 0.0
    %477 = vmatpush1.msra.mxu0 0.0
    %478 = vmatprep.subr.mxu0 0.0
    %479 = vmatpush1.msra.mxu0 0.0
    %480 = vmatprep.subr.mxu0 0.0
    %481 = vmatpush1.msra.mxu0 0.0
    %482 = vmatprep.subr.mxu0 0.0
    %483 = vmatpush1.msra.mxu0 0.0
    %484 = vmatprep.subr.mxu0 0.0
    %485 = vmatpush1.msra.mxu0 0.0
    %486 = vmatprep.subr.mxu0 0.0
    %487 = vmatpush1.msra.mxu0 0.0
    %488 = vmatprep.subr.mxu0 0.0
    %489 = vmatpush1.msra.mxu0 0.0
    %490 = vmatprep.subr.mxu0 0.0
    %491 = vmatpush1.msra.mxu0 0.0
    %492 = vmatprep.mubr.f32.mxu0 0.0
    %v493 = vand.u32 %v146, 4294901760
    %v494 = vsub.f32 %v146, %v493
    %v495 = vand.u32 %v494, 4294901760
    %496 = vmatmul.mubr.f32.gmra.mrb[0].mxu0 %v495
    %v497 = vpop.f32.mrb[0].mxu0
    %v498 = vadd.f32 %v414, %v497
    %v499 = vpop.f32.mrb[0].mxu0
    %500 = vmatprep.mubr.f32.mxu0 0.0
    %v501 = vand.u32 %v149, 4294901760
    %v502 = vsub.f32 %v149, %v501
    %v503 = vand.u32 %v502, 4294901760
    %504 = vmatmul.mubr.f32.gmra.mrb[0].mxu0 %v503
    %v505 = vpop.f32.mrb[0].mxu0
    %v506 = vadd.f32 %v421, %v505
    %v507 = vpop.f32.mrb[0].mxu0
    %508 = vdwg.mxu0
    %509 = vmatprep.subr.mxu0 0.0
    %v510 = vand.u32 %v140, 4294901760
    %v511 = vsub.f32 %v140, %v510
    %v512 = vand.u32 %v511, 4294901760
    %513 = vmatpush1.msra.mxu0 %v512
    %514 = vmatprep.subr.mxu0 0.0
    %v515 = vand.u32 %v141, 4294901760
    %v516 = vsub.f32 %v141, %v515
    %v517 = vand.u32 %v516, 4294901760
    %518 = vmatpush1.msra.mxu0 %v517
    %519 = vmatprep.subr.mxu0 0.0
    %v520 = vand.u32 %v142, 4294901760
    %v521 = vsub.f32 %v142, %v520
    %v522 = vand.u32 %v521, 4294901760
    %523 = vmatpush1.msra.mxu0 %v522
    %524 = vmatprep.subr.mxu0 0.0
    %v525 = vand.u32 %v143, 4294901760
    %v526 = vsub.f32 %v143, %v525
    %v527 = vand.u32 %v526, 4294901760
    %528 = vmatpush1.msra.mxu0 %v527
    %529 = vmatprep.subr.mxu0 0.0
    %530 = vmatpush1.msra.mxu0 0.0
    %531 = vmatprep.subr.mxu0 0.0
    %532 = vmatpush1.msra.mxu0 0.0
    %533 = vmatprep.subr.mxu0 0.0
    %534 = vmatpush1.msra.mxu0 0.0
    %535 = vmatprep.subr.mxu0 0.0
    %536 = vmatpush1.msra.mxu0 0.0
    %537 = vmatprep.subr.mxu0 0.0
    %538 = vmatpush1.msra.mxu0 0.0
    %539 = vmatprep.subr.mxu0 0.0
    %540 = vmatpush1.msra.mxu0 0.0
    %541 = vmatprep.subr.mxu0 0.0
    %542 = vmatpush1.msra.mxu0 0.0
    %543 = vmatprep.subr.mxu0 0.0
    %544 = vmatpush1.msra.mxu0 0.0
    %545 = vmatprep.subr.mxu0 0.0
    %546 = vmatpush1.msra.mxu0 0.0
    %547 = vmatprep.subr.mxu0 0.0
    %548 = vmatpush1.msra.mxu0 0.0
    %549 = vmatprep.subr.mxu0 0.0
    %550 = vmatpush1.msra.mxu0 0.0
    %551 = vmatprep.subr.mxu0 0.0
    %552 = vmatpush1.msra.mxu0 0.0
    %553 = vmatprep.subr.mxu0 0.0
    %554 = vmatpush1.msra.mxu0 0.0
    %555 = vmatprep.subr.mxu0 0.0
    %556 = vmatpush1.msra.mxu0 0.0
    %557 = vmatprep.subr.mxu0 0.0
    %558 = vmatpush1.msra.mxu0 0.0
    %559 = vmatprep.subr.mxu0 0.0
    %560 = vmatpush1.msra.mxu0 0.0
    %561 = vmatprep.subr.mxu0 0.0
    %562 = vmatpush1.msra.mxu0 0.0
    %563 = vmatprep.subr.mxu0 0.0
    %564 = vmatpush1.msra.mxu0 0.0
    %565 = vmatprep.subr.mxu0 0.0
    %566 = vmatpush1.msra.mxu0 0.0
    %567 = vmatprep.subr.mxu0 0.0
    %568 = vmatpush1.msra.mxu0 0.0
    %569 = vmatprep.subr.mxu0 0.0
    %570 = vmatpush1.msra.mxu0 0.0
    %571 = vmatprep.subr.mxu0 0.0
    %572 = vmatpush1.msra.mxu0 0.0
    %573 = vmatprep.subr.mxu0 0.0
    %574 = vmatpush1.msra.mxu0 0.0
    %575 = vmatprep.subr.mxu0 0.0
    %576 = vmatpush1.msra.mxu0 0.0
    %577 = vmatprep.subr.mxu0 0.0
    %578 = vmatpush1.msra.mxu0 0.0
    %579 = vmatprep.subr.mxu0 0.0
    %580 = vmatpush1.msra.mxu0 0.0
    %581 = vmatprep.subr.mxu0 0.0
    %582 = vmatpush1.msra.mxu0 0.0
    %583 = vmatprep.subr.mxu0 0.0
    %584 = vmatpush1.msra.mxu0 0.0
    %585 = vmatprep.mubr.f32.mxu0 0.0
    %v586 = vand.u32 %v146, 4294901760
    %587 = vmatmul.mubr.f32.gmra.mrb[0].mxu0 %v586
    %v588 = vpop.f32.mrb[0].mxu0
    %v589 = vadd.f32 %v498, %v588
    %v590 = vpop.f32.mrb[0].mxu0
    %591 = vmatprep.mubr.f32.mxu0 0.0
    %v592 = vand.u32 %v149, 4294901760
    %593 = vmatmul.mubr.f32.gmra.mrb[0].mxu0 %v592
    %v594 = vpop.f32.mrb[0].mxu0
    %v595 = vadd.f32 %v506, %v594
    %v596 = vpop.f32.mrb[0].mxu0
    %597 = vdwg.mxu0
    %598 = vmatprep.subr.mxu0 0.0
    %v599 = vand.u32 %v140, 4294901760
    %600 = vmatpush1.msra.mxu0 %v599
    %601 = vmatprep.subr.mxu0 0.0
    %v602 = vand.u32 %v141, 4294901760
    %603 = vmatpush1.msra.mxu0 %v602
    %604 = vmatprep.subr.mxu0 0.0
    %v605 = vand.u32 %v142, 4294901760
    %606 = vmatpush1.msra.mxu0 %v605
    %607 = vmatprep.subr.mxu0 0.0
    %v608 = vand.u32 %v143, 4294901760
    %609 = vmatpush1.msra.mxu0 %v608
    %610 = vmatprep.subr.mxu0 0.0
    %611 = vmatpush1.msra.mxu0 0.0
    %612 = vmatprep.subr.mxu0 0.0
    %613 = vmatpush1.msra.mxu0 0.0
    %614 = vmatprep.subr.mxu0 0.0
    %615 = vmatpush1.msra.mxu0 0.0
    %616 = vmatprep.subr.mxu0 0.0
    %617 = vmatpush1.msra.mxu0 0.0
    %618 = vmatprep.subr.mxu0 0.0
    %619 = vmatpush1.msra.mxu0 0.0
    %620 = vmatprep.subr.mxu0 0.0
    %621 = vmatpush1.msra.mxu0 0.0
    %622 = vmatprep.subr.mxu0 0.0
    %623 = vmatpush1.msra.mxu0 0.0
    %624 = vmatprep.subr.mxu0 0.0
    %625 = vmatpush1.msra.mxu0 0.0
    %626 = vmatprep.subr.mxu0 0.0
    %627 = vmatpush1.msra.mxu0 0.0
    %628 = vmatprep.subr.mxu0 0.0
    %629 = vmatpush1.msra.mxu0 0.0
    %630 = vmatprep.subr.mxu0 0.0
    %631 = vmatpush1.msra.mxu0 0.0
    %632 = vmatprep.subr.mxu0 0.0
    %633 = vmatpush1.msra.mxu0 0.0
    %634 = vmatprep.subr.mxu0 0.0
    %635 = vmatpush1.msra.mxu0 0.0
    %636 = vmatprep.subr.mxu0 0.0
    %637 = vmatpush1.msra.mxu0 0.0
    %638 = vmatprep.subr.mxu0 0.0
    %639 = vmatpush1.msra.mxu0 0.0
    %640 = vmatprep.subr.mxu0 0.0
    %641 = vmatpush1.msra.mxu0 0.0
    %642 = vmatprep.subr.mxu0 0.0
    %643 = vmatpush1.msra.mxu0 0.0
    %644 = vmatprep.subr.mxu0 0.0
    %645 = vmatpush1.msra.mxu0 0.0
    %646 = vmatprep.subr.mxu0 0.0
    %647 = vmatpush1.msra.mxu0 0.0
    %648 = vmatprep.subr.mxu0 0.0
    %649 = vmatpush1.msra.mxu0 0.0
    %650 = vmatprep.subr.mxu0 0.0
    %651 = vmatpush1.msra.mxu0 0.0
    %652 = vmatprep.subr.mxu0 0.0
    %653 = vmatpush1.msra.mxu0 0.0
    %654 = vmatprep.subr.mxu0 0.0
    %655 = vmatpush1.msra.mxu0 0.0
    %656 = vmatprep.subr.mxu0 0.0
    %657 = vmatpush1.msra.mxu0 0.0
    %658 = vmatprep.subr.mxu0 0.0
    %659 = vmatpush1.msra.mxu0 0.0
    %660 = vmatprep.subr.mxu0 0.0
    %661 = vmatpush1.msra.mxu0 0.0
    %662 = vmatprep.subr.mxu0 0.0
    %663 = vmatpush1.msra.mxu0 0.0
    %664 = vmatprep.subr.mxu0 0.0
    %665 = vmatpush1.msra.mxu0 0.0
    %666 = vmatprep.mubr.f32.mxu0 0.0
    %v667 = vand.u32 %v146, 4294901760
    %668 = vmatmul.mubr.f32.gmra.mrb[0].mxu0 %v667
    %v669 = vpop.f32.mrb[0].mxu0
    %v670 = vadd.f32 %v589, %v669
    %v671 = vpop.f32.mrb[0].mxu0
    %672 = vmatprep.mubr.f32.mxu0 0.0
    %v673 = vand.u32 %v149, 4294901760
    %674 = vmatmul.mubr.f32.gmra.mrb[0].mxu0 %v673
    %v675 = vpop.f32.mrb[0].mxu0
    %v676 = vadd.f32 %v595, %v675
    %v677 = vpop.f32.mrb[0].mxu0
    %678 = vdwg.mxu0
    %v679 = vadd.f32 %v134, %v670
    %v680 = vadd.f32 %v135, %v676
    %681 = vst.msk [vmem:[#allocation4] sm:$0xff] %vm144, %v679
    %682 = vst.msk [vmem:[#allocation4 + $0x8] sm:$0xff] %vm144, %v680
    // Predicated region
    $region38: #{tpu_custom_call.1} parent=1 // pred_check
      %p683 = pneg %p50
    $region39: #{tpu_custom_call.1} parent=1 // pred_check_branch
      %685 = sbr.rel (%p683) target = $region41
    $region40: #{tpu_custom_call.1} parent=1 // pred_region
      %v686 = vld [vmem:[#allocation4] sm:$0xff]
      %v687 = vld [vmem:[#allocation4 + $0x8] sm:$0xff]
      %v688 = vld [vmem:[%s4] sm:$0x1]
      %v690 = vlaneseq
      %v691 = vshrl.u32 %v690, 7
      %v692 = vsub.s32 0, %v691
      %v693 = vrot.slane %v688, %v692
      %v695 = vadd.f32 %v686, %v693
      %v696 = vadd.f32 %v687, %v693
      %s697 = smul.u32 0, 16
      %s698 = scalar_lea.vmem [#allocation3], %s697
      %v699 = vld [vmem:[%s698] sm:$0xff]
      %v700 = vld [vmem:[%s698 + $0x8] sm:$0xff]
      %v701 = vadd.f32 %v699, %v695
      %v702 = vadd.f32 %v700, %v696
      %703 = vst.msk [vmem:[#allocation10] sm:$0xff] %vm144, %v701
      %704 = vst.msk [vmem:[#allocation10 + $0x8] sm:$0xff] %vm144, %v702
    $region41: #{tpu_custom_call.1} parent=1 // pred_fallthru
      _
    // Predicated region
    $region42: #{tpu_custom_call.1} parent=1 // pred_check
      _
    $region43: #{tpu_custom_call.1} parent=1 // pred_check_branch
      %706 = sbr.rel (0) target = $region45
    $region44: #{tpu_custom_call.1} parent=1 // pred_region
      %s708 = ssub.s32 256, 256
      %709 = vsyncadd [#allocation7], %s708
      %s710 = sshll.u32 [#allocation10], 4
      %s711 = int_to_ptr.vmem [resolvable:$true] %s710
      %716 = dma.vmem_to_hbm [thread:$0]  %s711, 256, %s5, [#allocation7], 128, 128, 8
    $region45: #{tpu_custom_call.1} parent=1 // pred_fallthru
      _
    // Predicated region
    $region46: #{tpu_custom_call.1} parent=1 // pred_check
      _
    $region47: #{tpu_custom_call.1} parent=1 // pred_check_branch
      %718 = sbr.rel (0) target = $region49
    $region48: #{tpu_custom_call.1} parent=1 // pred_region
      %719 = dma.done [#allocation7], 256
    $region49: #{tpu_custom_call.1} parent=1 // pred_fallthru
      _
    %720 = vsyncpa [#allocation6], 1
    %721 = vsyncpa [#allocation9], 1
    %722 = vsyncpa [#allocation7], 1

</llo_original>
